<compile_context>
chip_gen: v5e
topology: v5e:2x2
jax: 0.10.0
libtpu: 0.0.40
codegen_flags: <defaults>
</compile_context>

<pallas_src>
import jax
import jax.numpy as jnp
from jax.experimental import pallas as pl
from jax.experimental.pallas import tpu as pltpu

B = 8     # batch
D = 128   # flattened feature dim

LAMBDA_C = 0.5
DISCRIMINANT_PIVOT = 0.5   # sigmoid(z) >= 0.5  <=>  z >= 0


def _si_bce_kernel(x_ref, w_ref, b_ref, y_ref, out_ref):
    x = x_ref[...]                                    # (B, D) f32 — one (8,128) vreg
    w = w_ref[...]                                    # (2, D) f32 — lane-dense
    y = y_ref[...]                                    # (B, 1) f32 in {0, 1}

    # ---- heads: VPU multiply + XLU lane-reduce (no MXU at this shape) ----
    h1_logit = jnp.sum(x * w[0:1, :], axis=1, keepdims=True) + b_ref[0]   # (B, 1)
    h2_logit = jnp.sum(x * w[1:2, :], axis=1, keepdims=True) + b_ref[1]   # (B, 1)

    # ---- h1 head: sigmoid only needed as the dissonance weight; label
    #      compare runs on the logit (no wait on the EUP result) ----
    h1_sig = jax.nn.sigmoid(h1_logit)                 # (B, 1)
    h1_labels = (h1_logit >= 0.0).astype(jnp.float32)
    h1_correct = h1_labels == y                       # support mask (y is exact 0/1)

    # ---- h2 BCE log terms from the logit, shared softplus computed once ----
    # softplus(-|z|) = log(1 + exp(-|z|)); identical for +/- z, so CSE it.
    sp = jnp.log(1.0 + jnp.exp(-jnp.abs(h2_logit)))
    log_h2 = jnp.minimum(h2_logit, 0.0) - sp          # log(sigmoid(z2))
    log_1m_h2 = jnp.minimum(-h2_logit, 0.0) - sp      # log(1 - sigmoid(z2))

    # ---- per-row terms ----
    diss_terms = -h1_sig * log_h2 - (1.0 - h1_sig) * log_1m_h2
    base_terms = (-y * jnp.maximum(log_h2, -100.0)
                  - (1.0 - y) * jnp.maximum(log_1m_h2, -100.0))

    # ---- single fused reduction: mean(base) + lambda_c * sum(masked diss) ----
    terms = base_terms * (1.0 / B) + LAMBDA_C * jnp.where(h1_correct, diss_terms, 0.0)
    out_ref[0] = jnp.sum(terms)


def strict_imitation_bce_loss(x, w1, b1, w2, b2, y):
    """x: (B, D) f32, w*: (D, 1) f32, b*: (1, 1) f32, y: (B, 1) f32 -> scalar."""
    # Fuse the two heads lane-dense: one (2, D) weight (single padded VMEM tile)
    # and the two scalar biases packed into a (2,) SMEM operand.
    w_t = jnp.stack([w1[:, 0], w2[:, 0]], axis=0)                # (2, D)
    b = jnp.concatenate([b1.reshape(-1), b2.reshape(-1)])        # (2,)

    cost = pl.CostEstimate(
        flops=2 * B * D * 2 + 16 * B,            # two dot products + elementwise
        transcendentals=3 * B,                   # sigmoid + exp + log per row
        bytes_accessed=(x.size + w_t.size + y.size + b.size + 1) * 4,
    )

    out = pl.pallas_call(
        _si_bce_kernel,
        out_shape=jax.ShapeDtypeStruct((1,), jnp.float32),
        in_specs=[
            pl.BlockSpec(memory_space=pltpu.MemorySpace.VMEM),   # x    (whole array)
            pl.BlockSpec(memory_space=pltpu.MemorySpace.VMEM),   # w_t  (whole array)
            pl.BlockSpec(memory_space=pltpu.MemorySpace.SMEM),   # b    (scalars)
            pl.BlockSpec(memory_space=pltpu.MemorySpace.VMEM),   # y    (whole array)
        ],
        out_specs=pl.BlockSpec(memory_space=pltpu.MemorySpace.SMEM),  # scalar loss
        cost_estimate=cost,
    )(x, w_t, b, y)
    return out[0]


def _reference(x, w1, b1, w2, b2, y):
    """Pure-JAX reference mirroring the PyTorch forward semantics."""
    h1_sig = jax.nn.sigmoid(x @ w1 + b1)
    h2_sig = jax.nn.sigmoid(x @ w2 + b2)
    labels = (h1_sig >= DISCRIMINANT_PIVOT).astype(jnp.float32)
    correct = (labels - y) == 0.0
    diss = jnp.sum(
        jnp.where(correct,
                  -h1_sig * jnp.log(h2_sig) - (1.0 - h1_sig) * jnp.log(1.0 - h2_sig),
                  0.0))
    base = jnp.mean(-y * jnp.maximum(jnp.log(h2_sig), -100.0)
                    - (1.0 - y) * jnp.maximum(jnp.log(1.0 - h2_sig), -100.0))
    return base + LAMBDA_C * diss


if __name__ == "__main__":
    key = jax.random.PRNGKey(0)
    kx, kw1, kb1, kw2, kb2, ky = jax.random.split(key, 6)

    x = jax.random.normal(kx, (B, D), dtype=jnp.float32)
    w1 = jax.random.normal(kw1, (D, 1), dtype=jnp.float32) * 0.1
    b1 = jax.random.normal(kb1, (1, 1), dtype=jnp.float32) * 0.1
    w2 = jax.random.normal(kw2, (D, 1), dtype=jnp.float32) * 0.1
    b2 = jax.random.normal(kb2, (1, 1), dtype=jnp.float32) * 0.1
    y = jax.random.bernoulli(ky, 0.5, (B, 1)).astype(jnp.float32)

    loss = strict_imitation_bce_loss(x, w1, b1, w2, b2, y)
    jax.block_until_ready(loss)

    ref = _reference(x, w1, b1, w2, b2, y)
    assert jnp.allclose(loss, ref, rtol=1e-5, atol=1e-5), (loss, ref)

    print("KERNEL_OK")
</pallas_src>

<mosaic_0001>
module attributes {stable_mosaic.version = 11 : i64} {
  func.func @_si_bce_kernel(%arg0: memref<8x128xf32, #tpu.memory_space<vmem>>, %arg1: memref<2x128xf32, #tpu.memory_space<vmem>>, %arg2: memref<2xf32, #tpu.memory_space<smem>>, %arg3: memref<8x1xf32, #tpu.memory_space<vmem>>, %arg4: memref<1xf32, #tpu.memory_space<smem>>) attributes {dimension_semantics = [], scalar_prefetch = 0 : i64, scratch_operands = 0 : i64, tpu.core_type = #tpu.core_type<tc>} {
    %c0 = arith.constant 0 : index
    %c0_0 = arith.constant 0 : index
    %0 = vector.load %arg0[%c0, %c0_0] : memref<8x128xf32, #tpu.memory_space<vmem>>, vector<8x128xf32>
    %c0_1 = arith.constant 0 : index
    %c0_2 = arith.constant 0 : index
    %1 = vector.load %arg1[%c0_1, %c0_2] : memref<2x128xf32, #tpu.memory_space<vmem>>, vector<2x128xf32>
    %c0_3 = arith.constant 0 : index
    %c0_4 = arith.constant 0 : index
    %2 = vector.load %arg3[%c0_3, %c0_4] : memref<8x1xf32, #tpu.memory_space<vmem>>, vector<8x1xf32>
    %3 = vector.extract_strided_slice %1 {offsets = [0, 0], sizes = [1, 128], strides = [1, 1]} : vector<2x128xf32> to vector<1x128xf32>
    %4 = vector.broadcast %3 : vector<1x128xf32> to vector<8x128xf32>
    %5 = arith.mulf %0, %4 : vector<8x128xf32>
    %cst = arith.constant dense<0.000000e+00> : vector<8xf32>
    %6 = vector.multi_reduction <add>, %5, %cst [1] : vector<8x128xf32> to vector<8xf32>
    %7 = vector.shape_cast %6 : vector<8xf32> to vector<8x1xf32>
    %c0_5 = arith.constant 0 : index
    %8 = memref.load %arg2[%c0_5] : memref<2xf32, #tpu.memory_space<smem>>
    %9 = vector.broadcast %8 : f32 to vector<8x1xf32>
    %10 = arith.addf %7, %9 : vector<8x1xf32>
    %11 = vector.extract_strided_slice %1 {offsets = [1, 0], sizes = [1, 128], strides = [1, 1]} : vector<2x128xf32> to vector<1x128xf32>
    %12 = vector.broadcast %11 : vector<1x128xf32> to vector<8x128xf32>
    %13 = arith.mulf %0, %12 : vector<8x128xf32>
    %cst_6 = arith.constant dense<0.000000e+00> : vector<8xf32>
    %14 = vector.multi_reduction <add>, %13, %cst_6 [1] : vector<8x128xf32> to vector<8xf32>
    %15 = vector.shape_cast %14 : vector<8xf32> to vector<8x1xf32>
    %c1 = arith.constant 1 : index
    %16 = memref.load %arg2[%c1] : memref<2xf32, #tpu.memory_space<smem>>
    %17 = vector.broadcast %16 : f32 to vector<8x1xf32>
    %18 = arith.addf %15, %17 : vector<8x1xf32>
    %19 = arith.negf %10 : vector<8x1xf32>
    %20 = math.exp %19 : vector<8x1xf32>
    %cst_7 = arith.constant 1.000000e+00 : f32
    %21 = vector.broadcast %cst_7 : f32 to vector<8x1xf32>
    %22 = arith.addf %21, %20 : vector<8x1xf32>
    %23 = arith.divf %21, %22 : vector<8x1xf32>
    %cst_8 = arith.constant 0.000000e+00 : f32
    %24 = vector.broadcast %cst_8 : f32 to vector<8x1xf32>
    %25 = arith.cmpf oge, %10, %24 : vector<8x1xf32>
    %26 = arith.extui %25 : vector<8x1xi1> to vector<8x1xi32>
    %27 = arith.sitofp %26 : vector<8x1xi32> to vector<8x1xf32>
    %28 = arith.cmpf oeq, %27, %2 : vector<8x1xf32>
    %29 = math.absf %18 : vector<8x1xf32>
    %cst_9 = arith.constant 0.000000e+00 : f32
    %30 = vector.broadcast %cst_9 : f32 to vector<8x1xf32>
    %31 = arith.subf %30, %29 : vector<8x1xf32>
    %32 = math.exp %31 : vector<8x1xf32>
    %cst_10 = arith.constant 1.000000e+00 : f32
    %33 = vector.broadcast %cst_10 : f32 to vector<8x1xf32>
    %34 = arith.addf %33, %32 : vector<8x1xf32>
    %35 = math.log %34 : vector<8x1xf32>
    %cst_11 = arith.constant 0.000000e+00 : f32
    %36 = vector.broadcast %cst_11 : f32 to vector<8x1xf32>
    %37 = arith.minimumf %18, %36 : vector<8x1xf32>
    %38 = arith.subf %37, %35 : vector<8x1xf32>
    %cst_12 = arith.constant 0.000000e+00 : f32
    %39 = vector.broadcast %cst_12 : f32 to vector<8x1xf32>
    %40 = arith.subf %39, %18 : vector<8x1xf32>
    %cst_13 = arith.constant 0.000000e+00 : f32
    %41 = vector.broadcast %cst_13 : f32 to vector<8x1xf32>
    %42 = arith.minimumf %40, %41 : vector<8x1xf32>
    %43 = arith.subf %42, %35 : vector<8x1xf32>
    %cst_14 = arith.constant 0.000000e+00 : f32
    %44 = vector.broadcast %cst_14 : f32 to vector<8x1xf32>
    %45 = arith.subf %44, %23 : vector<8x1xf32>
    %46 = arith.mulf %45, %38 : vector<8x1xf32>
    %cst_15 = arith.constant 1.000000e+00 : f32
    %47 = vector.broadcast %cst_15 : f32 to vector<8x1xf32>
    %48 = arith.subf %47, %23 : vector<8x1xf32>
    %49 = arith.mulf %48, %43 : vector<8x1xf32>
    %50 = arith.subf %46, %49 : vector<8x1xf32>
    %cst_16 = arith.constant 0.000000e+00 : f32
    %51 = vector.broadcast %cst_16 : f32 to vector<8x1xf32>
    %52 = arith.subf %51, %2 : vector<8x1xf32>
    %cst_17 = arith.constant -1.000000e+02 : f32
    %53 = vector.broadcast %cst_17 : f32 to vector<8x1xf32>
    %54 = arith.maximumf %38, %53 : vector<8x1xf32>
    %55 = arith.mulf %52, %54 : vector<8x1xf32>
    %cst_18 = arith.constant 1.000000e+00 : f32
    %56 = vector.broadcast %cst_18 : f32 to vector<8x1xf32>
    %57 = arith.subf %56, %2 : vector<8x1xf32>
    %cst_19 = arith.constant -1.000000e+02 : f32
    %58 = vector.broadcast %cst_19 : f32 to vector<8x1xf32>
    %59 = arith.maximumf %43, %58 : vector<8x1xf32>
    %60 = arith.mulf %57, %59 : vector<8x1xf32>
    %61 = arith.subf %55, %60 : vector<8x1xf32>
    %cst_20 = arith.constant 1.250000e-01 : f32
    %62 = vector.broadcast %cst_20 : f32 to vector<8x1xf32>
    %63 = arith.mulf %61, %62 : vector<8x1xf32>
    %cst_21 = arith.constant 0.000000e+00 : f32
    %64 = vector.broadcast %cst_21 : f32 to vector<8x1xf32>
    %65 = arith.select %28, %50, %64 : vector<8x1xi1>, vector<8x1xf32>
    %cst_22 = arith.constant 5.000000e-01 : f32
    %66 = vector.broadcast %cst_22 : f32 to vector<8x1xf32>
    %67 = arith.mulf %66, %65 : vector<8x1xf32>
    %68 = arith.addf %63, %67 : vector<8x1xf32>
    %69 = vector.shape_cast %68 : vector<8x1xf32> to vector<1x8x1xf32>
    %cst_23 = arith.constant dense<0.000000e+00> : vector<1xf32>
    %70 = vector.multi_reduction <add>, %69, %cst_23 [1, 2] : vector<1x8x1xf32> to vector<1xf32>
    %71 = vector.shape_cast %70 : vector<1xf32> to vector<1x1x1xf32>
    %72 = vector.extract %71[0, 0, 0] : f32 from vector<1x1x1xf32>
    %c0_24 = arith.constant 0 : index
    %73 = memref.load %arg4[%c0_24] : memref<1xf32, #tpu.memory_space<smem>>
    memref.store %72, %arg4[%c0_24] : memref<1xf32, #tpu.memory_space<smem>>
    return
  }
}

</mosaic_0001>

<llo_original>
// kernel: tpu_custom_call.1
$region0: #{tpu_custom_call.1}
  #allocation0 [shape = 'u32[]', space=smem, size = 0x4, offset = 0x4, fixed_abs, tag = 'smem constant byte address 0x4 - core index']
  #allocation1 [shape = 'u32[72,128]{1,0:T(1,128)}', space=vmem, size = 0x9000, scoped, tag = 'internal scratch']
  %s0 = inlined_call_operand.vmem [shape: f32[8,128], index: 0, kind: input, shape index: {}]
  %s1 = inlined_call_operand.hbm [shape: f32[2,128], index: 1, kind: input, shape index: {}]
  %s2 = inlined_call_operand.vmem [shape: f32[2], index: 2, kind: input, shape index: {}]
  %s3 = inlined_call_operand.vmem [shape: f32[8,1], index: 3, kind: input, shape index: {}]
  %s4 = inlined_call_operand.hbm [shape: f32[1], index: 4, kind: output, shape index: {}]
  %s5 = sld [smem:[#allocation0]]
  $region34: #{tpu_custom_call.1} parent=0
    _
  %s7 = ssub.s32 1, %s5
  %s8 = scalar_select 0, %s7, %s5
  $region1: #{tpu_custom_call.1} parent=0
    #allocation2 [shape = 'u8[1024]{0}', space=vmem, size = 0x400, scoped, tag = 'input window, operand 1, single buffered']
    #allocation3 [shape = 's32[1]{0}', space=sflag, size = 0x4, scoped, tag = 'scoped memory for tpu_custom_call.1']
    #allocation4 [shape = 's32[1]{0}', space=sflag, size = 0x4, scoped, tag = 'scoped memory for tpu_custom_call.1']
    #allocation5 [shape = 's32[1]{0}', space=sflag, size = 0x4, scoped, tag = 'scoped memory for tpu_custom_call.1']
    #allocation6 [shape = 'u8[512]{0}', space=smem, size = 0x200, scoped, tag = 'input window, operand 2, single buffered']
    #allocation7 [shape = 'u8[512]{0}', space=smem, size = 0x200, scoped, tag = 'output window, operand 0, single buffered']
    %9 = vsyncpa [#allocation3], 0
    %10 = vsyncpa [#allocation5], 0
    %11 = vsyncpa [#allocation4], 0
    // Predicated region
    $region2: #{tpu_custom_call.1} parent=1 // pred_check
      _
    $region3: #{tpu_custom_call.1} parent=1 // pred_check_branch
      %13 = sbr.rel (0) target = $region5
    $region4: #{tpu_custom_call.1} parent=1 // pred_region
      _
    $region5: #{tpu_custom_call.1} parent=1 // pred_fallthru
      _
    // Predicated region
    $region6: #{tpu_custom_call.1} parent=1 // pred_check
      _
    $region7: #{tpu_custom_call.1} parent=1 // pred_check_branch
      %15 = sbr.rel (0) target = $region9
    $region8: #{tpu_custom_call.1} parent=1 // pred_region
      %17 = vsyncadd [#allocation3], 0
      %s19 = sshll.u32 %s1, 4
      %s20 = int_to_ptr.hbm [resolvable:$true] %s19
      %s21 = sshll.u32 [#allocation2], 4
      %s22 = int_to_ptr.vmem [resolvable:$true] %s21
      %24 = dma.hbm_to_vmem [thread:$0]  %s20, 32, %s22, [#allocation3]
    $region9: #{tpu_custom_call.1} parent=1 // pred_fallthru
      _
    // Predicated region
    $region10: #{tpu_custom_call.1} parent=1 // pred_check
      _
    $region11: #{tpu_custom_call.1} parent=1 // pred_check_branch
      %26 = sbr.rel (0) target = $region13
    $region12: #{tpu_custom_call.1} parent=1 // pred_region
      %28 = vsyncadd [#allocation5], 0
      %s30 = sshll.u32 %s2, 4
      %s31 = int_to_ptr.vmem [resolvable:$true] %s30
      %33 = dma.vmem_to_smem %s31, 16, [#allocation6], [#allocation5]
    $region13: #{tpu_custom_call.1} parent=1 // pred_fallthru
      _
    // Predicated region
    $region14: #{tpu_custom_call.1} parent=1 // pred_check
      _
    $region15: #{tpu_custom_call.1} parent=1 // pred_check_branch
      %35 = sbr.rel (0) target = $region17
    $region16: #{tpu_custom_call.1} parent=1 // pred_region
      _
    $region17: #{tpu_custom_call.1} parent=1 // pred_fallthru
      _
    // Predicated region
    $region18: #{tpu_custom_call.1} parent=1 // pred_check
      _
    $region19: #{tpu_custom_call.1} parent=1 // pred_check_branch
      %37 = sbr.rel (0) target = $region21
    $region20: #{tpu_custom_call.1} parent=1 // pred_region
      %39 = dma.done [#allocation3], 32
    $region21: #{tpu_custom_call.1} parent=1 // pred_fallthru
      _
    // Predicated region
    $region22: #{tpu_custom_call.1} parent=1 // pred_check
      _
    $region23: #{tpu_custom_call.1} parent=1 // pred_check_branch
      %41 = sbr.rel (0) target = $region25
    $region24: #{tpu_custom_call.1} parent=1 // pred_region
      %43 = dma.done [#allocation5], 16
    $region25: #{tpu_custom_call.1} parent=1 // pred_fallthru
      _
    %44 = sfence
    %v45 = vld [vmem:[%s0] sm:$0xff]
    %v46 = vld [vmem:[#allocation2] sm:$0x3]
    %v47 = vld [vmem:[%s3] sm:$0xff]
    %v48 = vperm.slane %v46, 0
    %v49 = vmul.f32 %v45, %v48
    %50 = vadd.xlane.f32.xlu0 %v49
    %v51 = vpop.xlane.xlu0 %50
    %s52 = sld [smem:[#allocation6]]
    %v53 = vstv %s52
    %v54 = vadd.f32 %v51, %v53
    %v55 = vperm.slane %v46, 1
    %v56 = vmul.f32 %v45, %v55
    %57 = vadd.xlane.f32.xlu0 %v56
    %v58 = vpop.xlane.xlu0 %57
    %s59 = sld [smem:[#allocation6 + $0x1]]
    %v60 = vstv %s59
    %v61 = vadd.f32 %v58, %v60
    %v62 = vxor.u32 %v54, 2147483648
    %v63 = vmul.f32 %v62, 1.442695
    %v64 = vpow.pop %v63
    %v65 = vadd.f32 %v64, 1.0
    %v66 = vrcp.pop %v65
    %v67 = vmul.f32 %v65, %v66
    %v68 = vsub.f32 1.0, %v67
    %v69 = vmul.f32 %v66, %v68
    %v70 = vadd.f32 %v66, %v69
    %vm71 = vweird.f32 %v65
    %vm72 = vweird.f32 %v66
    %vm73 = vmor %vm71, %vm72
    %v74 = vsel %vm73, %v66, %v70
    %v75 = vand.u32 2147483647, %v65
    %vm76 = vcmp.eq.f32.partialorder %v75, 8.507059e+37
    %v77 = vand.u32 %v65, 2147483648
    %v78 = vor.u32 1.1754944e-38, %v77
    %v79 = vsel %vm76, %v78, %v74
    %v80 = vmul.f32 1.0, %v79
    %vm81 = vcmp.ge.f32.partialorder %v54, 0.0
    %v82 = vsel %vm81, 1, 0
    %v83 = vcvt.s32.f32 %v82
    %vm84 = vcmp.eq.f32.partialorder %v83, %v47
    %v85 = vand.u32 2147483647, %v61
    %v86 = vsub.f32 0.0, %v85
    %v87 = vmul.f32 %v86, 1.442695
    %v88 = vpow.pop %v87
    %v89 = vadd.f32 %v88, 1.0
    %v90 = vlog2.pop %v89
    %v91 = vmul.f32 %v90, 0.6931472
    %v92 = vmin.f32 %v61, 0.0
    %v93 = vsub.f32 %v92, %v91
    %v94 = vsub.f32 0.0, %v61
    %v95 = vmin.f32 %v94, 0.0
    %v96 = vsub.f32 %v95, %v91
    %v97 = vsub.f32 0.0, %v80
    %v98 = vmul.f32 %v97, %v93
    %v99 = vsub.f32 1.0, %v80
    %v100 = vmul.f32 %v99, %v96
    %v101 = vsub.f32 %v98, %v100
    %v102 = vsub.f32 0.0, %v47
    %v103 = vmax.f32 %v93, -100.0
    %v104 = vmul.f32 %v102, %v103
    %v105 = vsub.f32 1.0, %v47
    %v106 = vmax.f32 %v96, -100.0
    %v107 = vmul.f32 %v105, %v106
    %v108 = vsub.f32 %v104, %v107
    %v109 = vmul.f32 %v108, 0.125
    %v110 = vsel %vm84, %v101, 0.0
    %v111 = vmul.f32 %v110, 0.5
    %v112 = vadd.f32 %v109, %v111
    %vm113 = vcmask 7168
    %v114 = vsel %vm113, %v112, 0.0
    %115 = vadd.xlane.f32.xlu0 %v114
    %v116 = vpop.xlane.xlu0 %115
    %v117 = vrot.slane %v116, 4
    %v118 = vadd.f32 %v116, %v117
    %v119 = vrot.slane %v118, 2
    %v120 = vadd.f32 %v118, %v119
    %v121 = vrot.slane %v120, 1
    %v122 = vadd.f32 %v120, %v121
    %s123 = vtos %v122
    %s124 = scalar_lea.smem [#allocation7], 0
    %125 = sst [smem:[%s124]] %s123
    // Predicated region
    $region26: #{tpu_custom_call.1} parent=1 // pred_check
      _
    $region27: #{tpu_custom_call.1} parent=1 // pred_check_branch
      %127 = sbr.rel (0) target = $region29
    $region28: #{tpu_custom_call.1} parent=1 // pred_region
      %129 = vsyncadd [#allocation4], 0
      %s131 = sshll.u32 %s4, 4
      %s132 = int_to_ptr.hbm [resolvable:$true] %s131
      %134 = dma.smem_to_hbm [#allocation7], 16, %s132, [#allocation4]
    $region29: #{tpu_custom_call.1} parent=1 // pred_fallthru
      _
    // Predicated region
    $region30: #{tpu_custom_call.1} parent=1 // pred_check
      _
    $region31: #{tpu_custom_call.1} parent=1 // pred_check_branch
      %136 = sbr.rel (0) target = $region33
    $region32: #{tpu_custom_call.1} parent=1 // pred_region
      %138 = dma.done [#allocation4], 16
    $region33: #{tpu_custom_call.1} parent=1 // pred_fallthru
      _
    %139 = sfence
    %140 = vsyncpa [#allocation3], 1
    %141 = vsyncpa [#allocation4], 1
    %142 = vsyncpa [#allocation5], 1

</llo_original>
